<compile_context>
chip_gen: v7x
topology: tpu7x:2x2x1
jax: 0.10.0
libtpu: 0.0.40
codegen_flags: <defaults>
</compile_context>

<pallas_src>
import functools

import jax
import jax.numpy as jnp
from jax.experimental import pallas as pl
from jax.experimental.pallas import tpu as pltpu


def _vmem_limit_bytes():
    """Generation-aware scoped-VMEM request: half of physical, capped at 64 MiB."""
    try:
        cap = pltpu.get_tpu_info().vmem_capacity_bytes
    except Exception:
        cap = 64 * 1024 * 1024  # conservative fallback (v7x-sized)
    return int(min(cap // 2, 64 * 1024 * 1024))


# --------------------------------------------------------------------------------------
# pass A: per-channel sum / sum-of-squares of x (GBN1 statistics), megacore partial sums
# --------------------------------------------------------------------------------------
def _stats_kernel(x_ref, sum_ref, sq_ref, *, tm, m_rows, nt_per, ragged):
    @pl.when(pl.program_id(1) == 0)
    def _init():
        sum_ref[...] = jnp.zeros_like(sum_ref)
        sq_ref[...] = jnp.zeros_like(sq_ref)

    x = x_ref[...].astype(jnp.float32)
    if ragged:  # mask rows past M in the last (partial) tile
        row0 = (pl.program_id(0) * nt_per + pl.program_id(1)) * tm
        rows = row0 + jax.lax.broadcasted_iota(jnp.int32, x.shape, 0)
        x = jnp.where(rows < m_rows, x, 0.0)
    xr = x.reshape(tm // 8, 8, x.shape[-1])          # sublane-friendly partial reduce
    sum_ref[0] += jnp.sum(xr, axis=0)
    sq_ref[0] += jnp.sum(xr * xr, axis=0)


# --------------------------------------------------------------------------------------
# pass B: relu(bn1(x)) -> 1x1 conv (bf16 MXU matmul) -> bf16 h ; plus GBN2 sum / sumsq
# --------------------------------------------------------------------------------------
def _bn1_conv1_kernel(x_ref, scale1_ref, shift1_ref, w1_ref,
                      h_ref, sum_ref, sq_ref, *, tm, m_rows, nt_per, ragged):
    @pl.when(pl.program_id(1) == 0)
    def _init():
        sum_ref[...] = jnp.zeros_like(sum_ref)
        sq_ref[...] = jnp.zeros_like(sq_ref)

    x = x_ref[...].astype(jnp.float32)
    # normalize folded into one FMA: a1 = relu(x * scale + shift)
    a1 = jnp.maximum(x * scale1_ref[...] + shift1_ref[...], 0.0)
    h = jnp.dot(a1.astype(jnp.bfloat16), w1_ref[...],
                preferred_element_type=jnp.float32)          # (tm, Cmid), f32 accumulate
    h_ref[...] = h.astype(h_ref.dtype)                       # store bf16 (half HBM traffic)

    if ragged:
        row0 = (pl.program_id(0) * nt_per + pl.program_id(1)) * tm
        rows = row0 + jax.lax.broadcasted_iota(jnp.int32, h.shape, 0)
        h = jnp.where(rows < m_rows, h, 0.0)
    hr = h.reshape(tm // 8, 8, h.shape[-1])
    sum_ref[0] += jnp.sum(hr, axis=0)
    sq_ref[0] += jnp.sum(hr * hr, axis=0)


# --------------------------------------------------------------------------------------
# pass C: relu(bn2(h)) -> 3x3 conv (bf16 im2col, one deep-K matmul) -> split-store concat
# --------------------------------------------------------------------------------------
def _bn2_conv3_concat_kernel(h_ref, scale2_ref, shift2_ref, w2_ref, x_ref, out_ref):
    _, H, W, Cmid = h_ref.shape
    Cout = w2_ref.shape[1]

    h = h_ref[0].astype(jnp.float32)                         # bf16 load -> f32 BN math
    a2 = jnp.maximum(h * scale2_ref[...] + shift2_ref[...], 0.0).astype(jnp.bfloat16)

    # 1-pixel zero halo built by value concatenation (bf16, no VMEM scratch round trip).
    zr = jnp.zeros((1, W, Cmid), jnp.bfloat16)
    zc = jnp.zeros((H + 2, 1, Cmid), jnp.bfloat16)
    ap = jnp.concatenate([zr, a2, zr], axis=0)               # (H+2, W,   Cmid)
    ap = jnp.concatenate([zc, ap, zc], axis=1)               # (H+2, W+2, Cmid)

    # im2col: 9 shifted bf16 views stacked along channels -> single deep-K MXU matmul.
    patches = jnp.concatenate(
        [ap[dh:dh + H, dw:dw + W, :] for dh in range(3) for dw in range(3)],
        axis=-1)                                             # (H, W, 9*Cmid) bf16
    conv = jnp.dot(patches.reshape(H * W, 9 * Cmid), w2_ref[...],
                   preferred_element_type=jnp.float32)       # (H*W, Cout) f32
    conv = conv.reshape(H, W, Cout)

    # fused channel concat via two direct stores (no concatenated temp):
    out_ref[0, :, :, :Cout] = conv.astype(out_ref.dtype)
    out_ref[0, :, :, Cout:] = x_ref[0].astype(out_ref.dtype)


# --------------------------------------------------------------------------------------
# wrappers
# --------------------------------------------------------------------------------------
def bottleneck_gbn_nhwc(x_nhwc, g1, b1, w1, g2, b2, w2, *, eps=1e-5, tile_m=None):
    """NHWC-native entry. x: (N,H,W,Cin) -> (N,H,W,Cout+Cin)."""
    N, H, W, Cin = x_nhwc.shape
    Cmid = w1.shape[1]
    Cout = w2.shape[3]
    M = N * H * W

    # Row tiling: default 512 rows (roofline-friendly), multiple of 8, ragged last tile OK.
    tm = int(tile_m) if tile_m is not None else 512
    tm = max(8, (tm + 7) // 8 * 8)
    tm = min(tm, (M + 7) // 8 * 8)
    nt = pl.cdiv(M, tm)
    ns = 2 if (nt >= 2 and nt % 2 == 0) else 1      # megacore partial-sum split (v7x)
    nt_per = nt // ns
    ragged = (nt * tm != M)

    vlim = _vmem_limit_bytes()
    cp_acc = pltpu.CompilerParams(dimension_semantics=("parallel", "arbitrary"),
                                  vmem_limit_bytes=vlim)
    cp_par = pltpu.CompilerParams(dimension_semantics=("parallel",),
                                  vmem_limit_bytes=vlim)

    x2d = x_nhwc.reshape(M, Cin)

    # ---- pass A: GBN1 statistics (partial sums per core, reduced below) --------------
    stats_k = functools.partial(_stats_kernel, tm=tm, m_rows=M, nt_per=nt_per,
                                ragged=ragged)
    s1p, q1p = pl.pallas_call(
        stats_k,
        grid=(ns, nt_per),
        in_specs=[pl.BlockSpec((tm, Cin), lambda c, i: (c * nt_per + i, 0))],
        out_specs=(pl.BlockSpec((1, 8, Cin), lambda c, i: (c, 0, 0)),
                   pl.BlockSpec((1, 8, Cin), lambda c, i: (c, 0, 0))),
        out_shape=(jax.ShapeDtypeStruct((ns, 8, Cin), jnp.float32),
                   jax.ShapeDtypeStruct((ns, 8, Cin), jnp.float32)),
        compiler_params=cp_acc,
    )(x2d)

    # TODO(synk): GBN_invariant's ghost-batch split / running-stat tracking / eval mode are not
    # modeled; a single ghost batch (train-mode BN, biased variance) is used here.
    s1 = jnp.sum(s1p, axis=(0, 1))
    q1 = jnp.sum(q1p, axis=(0, 1))
    mean1 = s1 / M
    var1 = jnp.maximum(q1 / M - mean1 * mean1, 0.0)
    scale1 = (g1 * jax.lax.rsqrt(var1 + eps)).astype(jnp.float32)   # (1, Cin)
    shift1 = (b1 - mean1 * scale1).astype(jnp.float32)              # (1, Cin)

    # ---- pass B: relu(bn1) -> 1x1 conv (bf16 h out), plus GBN2 statistics -------------
    w1_bf = w1.astype(jnp.bfloat16)
    conv1_k = functools.partial(_bn1_conv1_kernel, tm=tm, m_rows=M, nt_per=nt_per,
                                ragged=ragged)
    h2d, s2p, q2p = pl.pallas_call(
        conv1_k,
        grid=(ns, nt_per),
        in_specs=[pl.BlockSpec((tm, Cin), lambda c, i: (c * nt_per + i, 0)),
                  pl.BlockSpec((1, Cin), lambda c, i: (0, 0)),
                  pl.BlockSpec((1, Cin), lambda c, i: (0, 0)),
                  pl.BlockSpec((Cin, Cmid), lambda c, i: (0, 0))],
        out_specs=(pl.BlockSpec((tm, Cmid), lambda c, i: (c * nt_per + i, 0)),
                   pl.BlockSpec((1, 8, Cmid), lambda c, i: (c, 0, 0)),
                   pl.BlockSpec((1, 8, Cmid), lambda c, i: (c, 0, 0))),
        out_shape=(jax.ShapeDtypeStruct((M, Cmid), jnp.bfloat16),
                   jax.ShapeDtypeStruct((ns, 8, Cmid), jnp.float32),
                   jax.ShapeDtypeStruct((ns, 8, Cmid), jnp.float32)),
        compiler_params=cp_acc,
    )(x2d, scale1, shift1, w1_bf)

    s2 = jnp.sum(s2p, axis=(0, 1))
    q2 = jnp.sum(q2p, axis=(0, 1))
    mean2 = s2 / M
    var2 = jnp.maximum(q2 / M - mean2 * mean2, 0.0)
    scale2 = (g2 * jax.lax.rsqrt(var2 + eps)).astype(jnp.float32)   # (1, Cmid)
    shift2 = (b2 - mean2 * scale2).astype(jnp.float32)              # (1, Cmid)

    # ---- pass C: relu(bn2) -> 3x3 conv (bf16 im2col) -> fused split-store concat ------
    h_nhwc = h2d.reshape(N, H, W, Cmid)
    w2_bf = w2.reshape(9 * Cmid, Cout).astype(jnp.bfloat16)   # row order (dh, dw, ci) = im2col

    out = pl.pallas_call(
        _bn2_conv3_concat_kernel,
        grid=(N,),
        in_specs=[pl.BlockSpec((1, H, W, Cmid), lambda n: (n, 0, 0, 0)),
                  pl.BlockSpec((1, Cmid), lambda n: (0, 0)),
                  pl.BlockSpec((1, Cmid), lambda n: (0, 0)),
                  pl.BlockSpec((9 * Cmid, Cout), lambda n: (0, 0)),
                  pl.BlockSpec((1, H, W, Cin), lambda n: (n, 0, 0, 0))],
        out_specs=pl.BlockSpec((1, H, W, Cout + Cin), lambda n: (n, 0, 0, 0)),
        out_shape=jax.ShapeDtypeStruct((N, H, W, Cout + Cin), x_nhwc.dtype),
        compiler_params=cp_par,
    )(h_nhwc, scale2, shift2, w2_bf, x_nhwc)
    return out


def bottleneck_gbn(x_nchw, g1, b1, w1, g2, b2, w2, *, eps=1e-5, tile_m=None):
    """NCHW wrapper matching the PyTorch module interface (transposes are XLA glue)."""
    x_nhwc = jnp.transpose(x_nchw, (0, 2, 3, 1))
    y = bottleneck_gbn_nhwc(x_nhwc, g1, b1, w1, g2, b2, w2, eps=eps, tile_m=tile_m)
    return jnp.transpose(y, (0, 3, 1, 2))


# -------------------------- plain-JAX reference for validation --------------------------
def _reference(x, g1, b1, w1, g2, b2, w2, eps=1e-5):
    def bn_relu(v, g, b):
        m = jnp.mean(v, axis=(0, 2, 3), keepdims=True)
        s = jnp.mean((v - m) ** 2, axis=(0, 2, 3), keepdims=True)
        y = (v - m) / jnp.sqrt(s + eps) * g.reshape(1, -1, 1, 1) + b.reshape(1, -1, 1, 1)
        return jnp.maximum(y, 0.0)

    a1 = bn_relu(x, g1, b1)
    w1_oihw = jnp.transpose(w1)[:, :, None, None]                  # (Cmid, Cin, 1, 1)
    h = jax.lax.conv_general_dilated(a1, w1_oihw, (1, 1), 'VALID')
    a2 = bn_relu(h, g2, b2)
    w2_oihw = jnp.transpose(w2, (3, 2, 0, 1))                      # (Cout, Cmid, 3, 3)
    out = jax.lax.conv_general_dilated(a2, w2_oihw, (1, 1), ((1, 1), (1, 1)))
    return jnp.concatenate([out, x], axis=1)


if __name__ == "__main__":
    key = jax.random.PRNGKey(0)
    N, H, W = 2, 16, 16
    in_planes, growth_rate = 16, 8
    Cmid, Cout = 4 * growth_rate, growth_rate

    k = jax.random.split(key, 7)
    x = jax.random.normal(k[0], (N, in_planes, H, W), jnp.float32)

    # Deterministic synthetic parameters (shapes implied by the module's __init__).
    g1 = 1.0 + 0.1 * jax.random.normal(k[1], (1, in_planes), jnp.float32)
    b1 = 0.1 * jax.random.normal(k[2], (1, in_planes), jnp.float32)
    w1 = jax.random.normal(k[3], (in_planes, Cmid), jnp.float32) / jnp.sqrt(in_planes)
    g2 = 1.0 + 0.1 * jax.random.normal(k[4], (1, Cmid), jnp.float32)
    b2 = 0.1 * jax.random.normal(k[5], (1, Cmid), jnp.float32)
    w2 = jax.random.normal(k[6], (3, 3, Cmid, Cout), jnp.float32) / jnp.sqrt(9 * Cmid)

    ref = jax.block_until_ready(_reference(x, g1, b1, w1, g2, b2, w2))

    # tile_m=128: 4 row-tiles -> megacore split (2 x 2), exercises the accumulator path.
    out = jax.block_until_ready(bottleneck_gbn(x, g1, b1, w1, g2, b2, w2, tile_m=128))
    assert out.shape == (N, Cout + in_planes, H, W), out.shape
    err = float(jnp.max(jnp.abs(out - ref)))
    # Tolerance loosened vs pure-f32: MXU operands and the stored h are bf16 (f32 accumulate).
    assert err < 5e-2, f"max abs error (tile_m=128) {err}"

    # tile_m=96: M=512 is not a multiple of 96 -> exercises the ragged-last-tile mask path.
    out2 = jax.block_until_ready(bottleneck_gbn(x, g1, b1, w1, g2, b2, w2, tile_m=96))
    err2 = float(jnp.max(jnp.abs(out2 - ref)))
    assert err2 < 5e-2, f"max abs error (tile_m=96, ragged) {err2}"

    print("KERNEL_OK")
</pallas_src>

<mosaic_0001>
module attributes {stable_mosaic.version = 11 : i64} {
  func.func @_stats_kernel(%arg0: i32, %arg1: i32, %arg2: memref<128x16xf32, #tpu.memory_space<vmem>>, %arg3: memref<1x8x16xf32, #tpu.memory_space<vmem>>, %arg4: memref<1x8x16xf32, #tpu.memory_space<vmem>>) attributes {dimension_semantics = [#tpu.dimension_semantics<parallel>, #tpu.dimension_semantics<arbitrary>], iteration_bounds = array<i64: 2, 2>, scalar_prefetch = 0 : i64, scratch_operands = 0 : i64, tpu.core_type = #tpu.core_type<tc>, window_params = [{transform_indices = @transform_0, window_bounds = array<i64: 128, 16>}, {transform_indices = @transform_1, window_bounds = array<i64: 1, 8, 16>}, {transform_indices = @transform_2, window_bounds = array<i64: 1, 8, 16>}]} {
    %c0_i32 = arith.constant 0 : i32
    %0 = arith.cmpi eq, %arg1, %c0_i32 : i32
    %1 = arith.extui %0 : i1 to i32
    %c0_i32_0 = arith.constant 0 : i32
    %2 = arith.cmpi ne, %1, %c0_i32_0 : i32
    scf.if %2 {
      %cst_15 = arith.constant 0.000000e+00 : f32
      %20 = vector.broadcast %cst_15 : f32 to vector<1x8x16xf32>
      %c0_16 = arith.constant 0 : index
      %c0_17 = arith.constant 0 : index
      %c0_18 = arith.constant 0 : index
      %21 = vector.load %arg3[%c0_16, %c0_17, %c0_18] : memref<1x8x16xf32, #tpu.memory_space<vmem>>, vector<1x8x16xf32>
      tpu.vector_store %arg3[%c0_16, %c0_17, %c0_18], %20 {strides = array<i32>} : memref<1x8x16xf32, #tpu.memory_space<vmem>>, vector<1x8x16xf32>,
      %cst_19 = arith.constant 0.000000e+00 : f32
      %22 = vector.broadcast %cst_19 : f32 to vector<1x8x16xf32>
      %c0_20 = arith.constant 0 : index
      %c0_21 = arith.constant 0 : index
      %c0_22 = arith.constant 0 : index
      %23 = vector.load %arg4[%c0_20, %c0_21, %c0_22] : memref<1x8x16xf32, #tpu.memory_space<vmem>>, vector<1x8x16xf32>
      tpu.vector_store %arg4[%c0_20, %c0_21, %c0_22], %22 {strides = array<i32>} : memref<1x8x16xf32, #tpu.memory_space<vmem>>, vector<1x8x16xf32>,
    } else {
    }
    %c0 = arith.constant 0 : index
    %c0_1 = arith.constant 0 : index
    %3 = vector.load %arg2[%c0, %c0_1] : memref<128x16xf32, #tpu.memory_space<vmem>>, vector<128x16xf32>
    %4 = vector.shape_cast %3 : vector<128x16xf32> to vector<16x8x16xf32>
    %c0_2 = arith.constant 0 : index
    %c0_3 = arith.constant 0 : index
    %c0_4 = arith.constant 0 : index
    %5 = vector.load %arg3[%c0_2, %c0_3, %c0_4] : memref<1x8x16xf32, #tpu.memory_space<vmem>>, vector<1x8x16xf32>
    %6 = vector.shape_cast %5 : vector<1x8x16xf32> to vector<8x16xf32>
    %cst = arith.constant dense<0.000000e+00> : vector<8x16xf32>
    %7 = vector.multi_reduction <add>, %4, %cst [0] : vector<16x8x16xf32> to vector<8x16xf32>
    %8 = arith.addf %6, %7 : vector<8x16xf32>
    %c0_5 = arith.constant 0 : index
    %c0_6 = arith.constant 0 : index
    %c0_7 = arith.constant 0 : index
    %9 = vector.load %arg3[%c0_5, %c0_6, %c0_7] : memref<1x8x16xf32, #tpu.memory_space<vmem>>, vector<1x8x16xf32>
    %10 = vector.shape_cast %9 : vector<1x8x16xf32> to vector<8x16xf32>
    %11 = vector.shape_cast %8 : vector<8x16xf32> to vector<1x8x16xf32>
    tpu.vector_store %arg3[%c0_5, %c0_6, %c0_7], %11 {strides = array<i32>} : memref<1x8x16xf32, #tpu.memory_space<vmem>>, vector<1x8x16xf32>,
    %c0_8 = arith.constant 0 : index
    %c0_9 = arith.constant 0 : index
    %c0_10 = arith.constant 0 : index
    %12 = vector.load %arg4[%c0_8, %c0_9, %c0_10] : memref<1x8x16xf32, #tpu.memory_space<vmem>>, vector<1x8x16xf32>
    %13 = vector.shape_cast %12 : vector<1x8x16xf32> to vector<8x16xf32>
    %14 = arith.mulf %4, %4 : vector<16x8x16xf32>
    %cst_11 = arith.constant dense<0.000000e+00> : vector<8x16xf32>
    %15 = vector.multi_reduction <add>, %14, %cst_11 [0] : vector<16x8x16xf32> to vector<8x16xf32>
    %16 = arith.addf %13, %15 : vector<8x16xf32>
    %c0_12 = arith.constant 0 : index
    %c0_13 = arith.constant 0 : index
    %c0_14 = arith.constant 0 : index
    %17 = vector.load %arg4[%c0_12, %c0_13, %c0_14] : memref<1x8x16xf32, #tpu.memory_space<vmem>>, vector<1x8x16xf32>
    %18 = vector.shape_cast %17 : vector<1x8x16xf32> to vector<8x16xf32>
    %19 = vector.shape_cast %16 : vector<8x16xf32> to vector<1x8x16xf32>
    tpu.vector_store %arg4[%c0_12, %c0_13, %c0_14], %19 {strides = array<i32>} : memref<1x8x16xf32, #tpu.memory_space<vmem>>, vector<1x8x16xf32>,
    return
  }
  func.func @transform_0(%arg0: i32, %arg1: i32) -> (i32, i32) {
    %c2_i32 = arith.constant 2 : i32
    %0 = arith.muli %arg0, %c2_i32 : i32
    %1 = arith.addi %0, %arg1 : i32
    %c0_i32 = arith.constant 0 : i32
    %c0_i32_0 = arith.constant 0 : i32
    return %1, %c0_i32 : i32, i32
  }
  func.func @transform_1(%arg0: i32, %arg1: i32) -> (i32, i32, i32) {
    %c0_i32 = arith.constant 0 : i32
    %c0_i32_0 = arith.constant 0 : i32
    %c0_i32_1 = arith.constant 0 : i32
    return %arg0, %c0_i32, %c0_i32_0 : i32, i32, i32
  }
  func.func @transform_2(%arg0: i32, %arg1: i32) -> (i32, i32, i32) {
    %c0_i32 = arith.constant 0 : i32
    %c0_i32_0 = arith.constant 0 : i32
    %c0_i32_1 = arith.constant 0 : i32
    return %arg0, %c0_i32, %c0_i32_0 : i32, i32, i32
  }
}

</mosaic_0001>

<llo_original>
// kernel: tpu_custom_call.1
$region0: #{tpu_custom_call.1}
  #allocation0 [shape = 'u32[]', space=smem, size = 0x4, offset = 0x4, fixed_abs, tag = 'smem constant byte address 0x4 - core index']
  #allocation1 [shape = 'u32[144,128]{1,0:T(1,128)}', space=vmem, size = 0x12000, scoped, tag = 'internal scratch']
  %s0 = inlined_call_operand.vmem [shape: f32[512,16], index: 0, kind: input, shape index: {}]
  %s1 = inlined_call_operand.hbm [shape: f32[2,8,16], index: 1, kind: output, shape index: {0}]
  %s2 = inlined_call_operand.hbm [shape: f32[2,8,16], index: 2, kind: output, shape index: {1}]
  %3 = xla_tuple %s1, %s2
  %s4 = sld [smem:[#allocation0]]
  $region49: #{tpu_custom_call.1} parent=0
    _
  %s6 = ssub.s32 1, %s4
  %s7 = scalar_select 0, %s6, %s4
  $region1: #{tpu_custom_call.1} parent=0
    #allocation2 [shape = 'u8[8192]{0}', space=vmem, size = 0x2000, scoped, tag = 'output window, operand 0']
    #allocation3 [shape = 's32[2]{0}', space=sflag, size = 0x8, scoped, tag = 'scoped memory for tpu_custom_call.1']
    #allocation4 [shape = 'u8[8192]{0}', space=vmem, size = 0x2000, scoped, tag = 'output window, operand 1']
    #allocation5 [shape = 's32[2]{0}', space=sflag, size = 0x8, scoped, tag = 'scoped memory for tpu_custom_call.1']
    %8 = vsyncpa [#allocation3], 0
    %s9 = scalar_lea.sflag [#allocation3], 1
    %10 = vsyncpa %s9, 0
    %11 = vsyncpa [#allocation5], 0
    %s12 = scalar_lea.sflag [#allocation5], 1
    %13 = vsyncpa %s12, 0
    loop: start=0, step=1, limit=6
    $region2: #{tpu_custom_call.1} parent=1 // loop_pre_header
      _
    $region3: #{tpu_custom_call.1} parent=1 // loop_header
      %s15 = sphi 0, %s19
      %p16 = scmp.ge.s32.totalorder %s15, 6
      %s22 = sphi 0, %s34
      %s23 = sphi 0, %s30
      %s24 = sphi 0, %s22
      %s25 = sphi 0, %s23
      %s26 = sphi 0, %s24
      %s27 = sphi 0, %s25
      %s41 = sphi 0, %s43
      %s44 = sphi 0, %s41
      %s45 = sphi 0, %s44
      %s61 = sphi 0, %s45
      %s67 = sphi 0, %s69
      %s70 = sphi 0, %s67
      %s71 = sphi 0, %s70
      %s87 = sphi 0, %s71
      %s93 = sphi 0, %s95
      %s96 = sphi 0, %s93
      %s97 = sphi 0, %s96
      %s113 = sphi 0, %s97
    $region4: #{tpu_custom_call.1} parent=1 // loop_header_branch
      %18 = sbr.rel (%p16) target = $region8
    $region5: #{tpu_custom_call.1} parent=1 // loop_body
      %s20 = ssub.s32 %s15, 1
      %s21 = ssub.s32 %s15, 2
      %s28 = sadd.s32 1, %s23
      %p29 = scmp.ge.s32.totalorder %s28, 2
      %s30 = scalar_select %p29, 0, %s28
      %s31 = sadd.s32 1, %s22
      %s32 = scalar_select %p29, %s31, %s22
      %p33 = scmp.ge.s32.totalorder %s32, 2
      %s34 = scalar_select %p33, 0, %s32
      %s35 = smul.u32 %s22, 2
      %s36 = sadd.s32 %s35, %s23
      %s37 = smul.u32 %s34, 2
      %s38 = sadd.s32 %s37, %s30
      %s39 = ssub.s32 %s36, %s38
      %p40 = scmp.eq.s32.totalorder %s39, 0
      %s42 = sadd.s32 %s41, 1
      %s43 = scalar_select %p40, %s41, %s42
      %p46 = pneg %p40
      %p47 = scmp.eq.s32.totalorder %s15, 3
      %p48 = por %p46, %p47
      %p49 = scmp.ne.s32.totalorder %s41, %s44
      %p50 = scmp.eq.s32.totalorder %s15, 0
      %p51 = por %p49, %p50
      %p52 = scmp.ne.s32.totalorder %s41, %s44
      %p53 = scmp.eq.s32.totalorder %s20, 3
      %p54 = por %p52, %p53
      %p55 = scmp.ne.s32.totalorder %s44, %s45
      %p56 = scmp.eq.s32.totalorder %s20, 0
      %p57 = por %p55, %p56
      %p58 = scmp.ne.s32.totalorder %s44, %s45
      %p59 = scmp.eq.s32.totalorder %s21, 3
      %p60 = por %p58, %p59
      %p62 = scmp.ne.s32.totalorder %s45, %s61
      %p63 = scmp.eq.s32.totalorder %s21, 0
      %p64 = por %p62, %p63
      %s65 = ssub.s32 %s22, %s34
      %p66 = scmp.eq.s32.totalorder %s65, 0
      %s68 = sadd.s32 %s67, 1
      %s69 = scalar_select %p66, %s67, %s68
      %p72 = pneg %p66
      %p73 = scmp.eq.s32.totalorder %s15, 3
      %p74 = por %p72, %p73
      %p75 = scmp.ne.s32.totalorder %s67, %s70
      %p76 = scmp.eq.s32.totalorder %s15, 0
      %p77 = por %p75, %p76
      %p78 = scmp.ne.s32.totalorder %s67, %s70
      %p79 = scmp.eq.s32.totalorder %s20, 3
      %p80 = por %p78, %p79
      %p81 = scmp.ne.s32.totalorder %s70, %s71
      %p82 = scmp.eq.s32.totalorder %s20, 0
      %p83 = por %p81, %p82
      %p84 = scmp.ne.s32.totalorder %s70, %s71
      %p85 = scmp.eq.s32.totalorder %s21, 3
      %p86 = por %p84, %p85
      %p88 = scmp.ne.s32.totalorder %s71, %s87
      %p89 = scmp.eq.s32.totalorder %s21, 0
      %p90 = por %p88, %p89
      %s91 = ssub.s32 %s22, %s34
      %p92 = scmp.eq.s32.totalorder %s91, 0
      %s94 = sadd.s32 %s93, 1
      %s95 = scalar_select %p92, %s93, %s94
      %p98 = pneg %p92
      %p99 = scmp.eq.s32.totalorder %s15, 3
      %p100 = por %p98, %p99
      %p101 = scmp.ne.s32.totalorder %s93, %s96
      %p102 = scmp.eq.s32.totalorder %s15, 0
      %p103 = por %p101, %p102
      %p104 = scmp.ne.s32.totalorder %s93, %s96
      %p105 = scmp.eq.s32.totalorder %s20, 3
      %p106 = por %p104, %p105
      %p107 = scmp.ne.s32.totalorder %s96, %s97
      %p108 = scmp.eq.s32.totalorder %s20, 0
      %p109 = por %p107, %p108
      %p110 = scmp.ne.s32.totalorder %s96, %s97
      %p111 = scmp.eq.s32.totalorder %s21, 3
      %p112 = por %p110, %p111
      %p114 = scmp.ne.s32.totalorder %s97, %s113
      %p115 = scmp.eq.s32.totalorder %s21, 0
      %p116 = por %p114, %p115
      %p117 = scmp.le.s32.totalorder 1, %s15
      %p118 = scmp.lt.s32.totalorder %s15, 5
      %p119 = pnand %p117, %p118
      %p120 = pneg %p119
      // Predicated region
      $region9: #{tpu_custom_call.1} parent=5 // pred_check
        _
      $region10: #{tpu_custom_call.1} parent=5 // pred_check_branch
        %122 = sbr.rel (%p119) target = $region12
      $region11: #{tpu_custom_call.1} parent=5 // pred_region
        %s123 = ssub.s32 %s15, 1
      $region12: #{tpu_custom_call.1} parent=5 // pred_fallthru
        _
      %p124 = scmp.lt.s32.totalorder %s15, 4
      // Predicated region
      $region13: #{tpu_custom_call.1} parent=5 // pred_check
        %p125 = pneg %p124
      $region14: #{tpu_custom_call.1} parent=5 // pred_check_branch
        %127 = sbr.rel (%p125) target = $region16
      $region15: #{tpu_custom_call.1} parent=5 // pred_region
        // Predicated region
        $region17: #{tpu_custom_call.1} parent=15 // pred_check
          %p128 = pneg %p51
        $region18: #{tpu_custom_call.1} parent=15 // pred_check_branch
          %130 = sbr.rel (%p128) target = $region20
        $region19: #{tpu_custom_call.1} parent=15 // pred_region
          %s131 = smul.u32 %s22, 2
          %s132 = sadd.s32 %s131, %s23
          %s133 = smul.u32 16, %s132
          %p134 = scmp.lt.s32.totalorder %s133, 63
          %s135 = scalar_select %p134, %s133, 63
          %s136 = smul.addr %s135, 8
          %s137 = scalar_lea.vmem %s0, %s136
          %s138 = smul.u32 %s22, 2
          %s139 = sadd.s32 %s138, %s23
          %s140 = smul.u32 16, %s139
        $region20: #{tpu_custom_call.1} parent=15 // pred_fallthru
          _
      $region16: #{tpu_custom_call.1} parent=5 // pred_fallthru
        _
      %p141 = scmp.le.s32.totalorder 1, %s15
      %p142 = scmp.lt.s32.totalorder %s15, 5
      %p143 = pnand %p141, %p142
      %p144 = pneg %p143
      // Predicated region
      $region21: #{tpu_custom_call.1} parent=5 // pred_check
        _
      $region22: #{tpu_custom_call.1} parent=5 // pred_check_branch
        %146 = sbr.rel (%p143) target = $region24
      $region23: #{tpu_custom_call.1} parent=5 // pred_region
        %s147 = ssub.s32 %s15, 1
        %s148 = smul.u32 %s24, 2
        %s149 = sadd.s32 %s148, %s25
        %s150 = smul.u32 16, %s149
        %p151 = scmp.lt.s32.totalorder %s150, 63
        %s152 = scalar_select %p151, %s150, 63
        %s153 = smul.addr %s152, 8
        %s154 = scalar_lea.vmem %s0, %s153
        %p155 = pneg %p57
        %p156 = pneg %p54
        %p157 = pneg %p83
        %p158 = pneg %p80
        %s159 = sand.u32 %s70, 1
        %s160 = scalar_lea.sflag [#allocation3], %s159
        %s161 = sand.u32 %s70, 1
        %s162 = smul.addr %s161, 8
        %s163 = scalar_lea.vmem [#allocation2], %s162
        %p164 = pneg %p109
        %p165 = pneg %p106
        %s166 = sand.u32 %s96, 1
        %s167 = scalar_lea.sflag [#allocation5], %s166
        %s168 = sand.u32 %s96, 1
        %s169 = smul.addr %s168, 8
        %s170 = scalar_lea.vmem [#allocation4], %s169
        %s171 = smul.u32 %s24, 2
        %s172 = sadd.s32 %s171, %s25
        %s173 = smul.u32 16, %s172
        %p174 = scmp.lt.s32.totalorder %s173, 63
        %s175 = scalar_select %p174, %s173, 63
        %s176 = smul.addr %s175, 8
        %s177 = scalar_lea.vmem %s0, %s176
        %s178 = smul.u32 %s24, 2
        %s179 = sadd.s32 %s178, %s25
        %s180 = smul.u32 16, %s179
        %p181 = scmp.eq.s32.totalorder %s25, 0
        // Predicated region
        $region25: #{tpu_custom_call.1} parent=23 // pred_check
          %p182 = pneg %p181
        $region26: #{tpu_custom_call.1} parent=23 // pred_check_branch
          %184 = sbr.rel (%p182) target = $region28
        $region27: #{tpu_custom_call.1} parent=23 // pred_region
          %vm185 = vcmask 130048
          %186 = vst.msk [vmem:[%s163] sm:$0xff] %vm185, 0.0
          %187 = vst.msk [vmem:[%s170] sm:$0xff] %vm185, 0.0
        $region28: #{tpu_custom_call.1} parent=23 // pred_fallthru
          _
        %v188 = vld [vmem:[%s177] sm:$0xff]
        %v189 = vld [vmem:[%s177 + $0x8] sm:$0xff]
        %v190 = vld [vmem:[%s177 + $0x10] sm:$0xff]
        %v191 = vld [vmem:[%s177 + $0x18] sm:$0xff]
        %v192 = vld [vmem:[%s177 + $0x20] sm:$0xff]
        %v193 = vld [vmem:[%s177 + $0x28] sm:$0xff]
        %v194 = vld [vmem:[%s177 + $0x30] sm:$0xff]
        %v195 = vld [vmem:[%s177 + $0x38] sm:$0xff]
        %v196 = vld [vmem:[%s177 + $0x40] sm:$0xff]
        %v197 = vld [vmem:[%s177 + $0x48] sm:$0xff]
        %v198 = vld [vmem:[%s177 + $0x50] sm:$0xff]
        %v199 = vld [vmem:[%s177 + $0x58] sm:$0xff]
        %v200 = vld [vmem:[%s177 + $0x60] sm:$0xff]
        %v201 = vld [vmem:[%s177 + $0x68] sm:$0xff]
        %v202 = vld [vmem:[%s177 + $0x70] sm:$0xff]
        %v203 = vld [vmem:[%s177 + $0x78] sm:$0xff]
        %v204 = vld [vmem:[%s163] sm:$0xff]
        %vm205 = vcmask 130048
        %v206 = vsel %vm205, %v188, 0.0
        %v207 = vsel %vm205, %v189, 0.0
        %v208 = vadd.f32 %v206, %v207
        %v209 = vsel %vm205, %v190, 0.0
        %v210 = vadd.f32 %v208, %v209
        %v211 = vsel %vm205, %v191, 0.0
        %v212 = vadd.f32 %v210, %v211
        %v213 = vsel %vm205, %v192, 0.0
        %v214 = vadd.f32 %v212, %v213
        %v215 = vsel %vm205, %v193, 0.0
        %v216 = vadd.f32 %v214, %v215
        %v217 = vsel %vm205, %v194, 0.0
        %v218 = vadd.f32 %v216, %v217
        %v219 = vsel %vm205, %v195, 0.0
        %v220 = vadd.f32 %v218, %v219
        %v221 = vsel %vm205, %v196, 0.0
        %v222 = vadd.f32 %v220, %v221
        %v223 = vsel %vm205, %v197, 0.0
        %v224 = vadd.f32 %v222, %v223
        %v225 = vsel %vm205, %v198, 0.0
        %v226 = vadd.f32 %v224, %v225
        %v227 = vsel %vm205, %v199, 0.0
        %v228 = vadd.f32 %v226, %v227
        %v229 = vsel %vm205, %v200, 0.0
        %v230 = vadd.f32 %v228, %v229
        %v231 = vsel %vm205, %v201, 0.0
        %v232 = vadd.f32 %v230, %v231
        %v233 = vsel %vm205, %v202, 0.0
        %v234 = vadd.f32 %v232, %v233
        %v235 = vsel %vm205, %v203, 0.0
        %v236 = vadd.f32 %v234, %v235
        %v237 = vadd.f32 %v204, %v236
        %238 = vst.msk [vmem:[%s163] sm:$0xff] %vm205, %v237
        %v239 = vld [vmem:[%s170] sm:$0xff]
        %v240 = vmul.f32 %v188, %v188
        %v241 = vmul.f32 %v189, %v189
        %v242 = vmul.f32 %v190, %v190
        %v243 = vmul.f32 %v191, %v191
        %v244 = vmul.f32 %v192, %v192
        %v245 = vmul.f32 %v193, %v193
        %v246 = vmul.f32 %v194, %v194
        %v247 = vmul.f32 %v195, %v195
        %v248 = vmul.f32 %v196, %v196
        %v249 = vmul.f32 %v197, %v197
        %v250 = vmul.f32 %v198, %v198
        %v251 = vmul.f32 %v199, %v199
        %v252 = vmul.f32 %v200, %v200
        %v253 = vmul.f32 %v201, %v201
        %v254 = vmul.f32 %v202, %v202
        %v255 = vmul.f32 %v203, %v203
        %v256 = vsel %vm205, %v240, 0.0
        %v257 = vsel %vm205, %v241, 0.0
        %v258 = vadd.f32 %v256, %v257
        %v259 = vsel %vm205, %v242, 0.0
        %v260 = vadd.f32 %v258, %v259
        %v261 = vsel %vm205, %v243, 0.0
        %v262 = vadd.f32 %v260, %v261
        %v263 = vsel %vm205, %v244, 0.0
        %v264 = vadd.f32 %v262, %v263
        %v265 = vsel %vm205, %v245, 0.0
        %v266 = vadd.f32 %v264, %v265
        %v267 = vsel %vm205, %v246, 0.0
        %v268 = vadd.f32 %v266, %v267
        %v269 = vsel %vm205, %v247, 0.0
        %v270 = vadd.f32 %v268, %v269
        %v271 = vsel %vm205, %v248, 0.0
        %v272 = vadd.f32 %v270, %v271
        %v273 = vsel %vm205, %v249, 0.0
        %v274 = vadd.f32 %v272, %v273
        %v275 = vsel %vm205, %v250, 0.0
        %v276 = vadd.f32 %v274, %v275
        %v277 = vsel %vm205, %v251, 0.0
        %v278 = vadd.f32 %v276, %v277
        %v279 = vsel %vm205, %v252, 0.0
        %v280 = vadd.f32 %v278, %v279
        %v281 = vsel %vm205, %v253, 0.0
        %v282 = vadd.f32 %v280, %v281
        %v283 = vsel %vm205, %v254, 0.0
        %v284 = vadd.f32 %v282, %v283
        %v285 = vsel %vm205, %v255, 0.0
        %v286 = vadd.f32 %v284, %v285
        %v287 = vadd.f32 %v239, %v286
        %288 = vst.msk [vmem:[%s170] sm:$0xff] %vm205, %v287
        %s289 = sand.u32 %s70, 1
        %s290 = scalar_lea.sflag [#allocation3], %s289
        %s291 = sand.u32 %s70, 1
        %s292 = smul.addr %s291, 8
        %s293 = scalar_lea.vmem [#allocation2], %s292
        %s294 = sand.u32 %s96, 1
        %s295 = scalar_lea.sflag [#allocation5], %s294
        %s296 = sand.u32 %s96, 1
        %s297 = smul.addr %s296, 8
        %s298 = scalar_lea.vmem [#allocation4], %s297
        // Predicated region
        $region29: #{tpu_custom_call.1} parent=23 // pred_check
          %p299 = pneg %p80
        $region30: #{tpu_custom_call.1} parent=23 // pred_check_branch
          %301 = sbr.rel (%p299) target = $region32
        $region31: #{tpu_custom_call.1} parent=23 // pred_region
          %s303 = ssub.s32 128, 128
          %304 = vsyncadd %s290, %s303
          %s305 = smul.addr %s24, 128
          %s306 = scalar_lea.hbm %s1, %s305
          %s308 = sshll.u32 %s293, 4
          %s309 = int_to_ptr.vmem [resolvable:$true] %s308
          %311 = dma.vmem_to_hbm [thread:$0]  %s309, 128, %s306, %s290
        $region32: #{tpu_custom_call.1} parent=23 // pred_fallthru
          _
        // Predicated region
        $region33: #{tpu_custom_call.1} parent=23 // pred_check
          %p312 = pneg %p106
        $region34: #{tpu_custom_call.1} parent=23 // pred_check_branch
          %314 = sbr.rel (%p312) target = $region36
        $region35: #{tpu_custom_call.1} parent=23 // pred_region
          %s316 = ssub.s32 128, 128
          %317 = vsyncadd %s295, %s316
          %s318 = smul.addr %s24, 128
          %s319 = scalar_lea.hbm %s2, %s318
          %s321 = sshll.u32 %s298, 4
          %s322 = int_to_ptr.vmem [resolvable:$true] %s321
          %324 = dma.vmem_to_hbm [thread:$0]  %s322, 128, %s319, %s295
        $region36: #{tpu_custom_call.1} parent=23 // pred_fallthru
          _
      $region24: #{tpu_custom_call.1} parent=5 // pred_fallthru
        _
      %p325 = scmp.le.s32.totalorder 2, %s15
      // Predicated region
      $region37: #{tpu_custom_call.1} parent=5 // pred_check
        %p326 = pneg %p325
      $region38: #{tpu_custom_call.1} parent=5 // pred_check_branch
        %328 = sbr.rel (%p326) target = $region40
      $region39: #{tpu_custom_call.1} parent=5 // pred_region
        %s329 = ssub.s32 %s15, 2
        // Predicated region
        $region41: #{tpu_custom_call.1} parent=39 // pred_check
          %p330 = pneg %p86
        $region42: #{tpu_custom_call.1} parent=39 // pred_check_branch
          %332 = sbr.rel (%p330) target = $region44
        $region43: #{tpu_custom_call.1} parent=39 // pred_region
          %s333 = sand.u32 %s71, 1
          %s334 = scalar_lea.sflag [#allocation3], %s333
          %s335 = sand.u32 %s71, 1
          %s336 = smul.addr %s335, 8
          %s337 = scalar_lea.vmem [#allocation2], %s336
          %338 = dma.done %s334, 128
        $region44: #{tpu_custom_call.1} parent=39 // pred_fallthru
          _
        // Predicated region
        $region45: #{tpu_custom_call.1} parent=39 // pred_check
          %p339 = pneg %p112
        $region46: #{tpu_custom_call.1} parent=39 // pred_check_branch
          %341 = sbr.rel (%p339) target = $region48
        $region47: #{tpu_custom_call.1} parent=39 // pred_region
          %s342 = sand.u32 %s97, 1
          %s343 = scalar_lea.sflag [#allocation5], %s342
          %s344 = sand.u32 %s97, 1
          %s345 = smul.addr %s344, 8
          %s346 = scalar_lea.vmem [#allocation4], %s345
          %347 = dma.done %s343, 128
        $region48: #{tpu_custom_call.1} parent=39 // pred_fallthru
          _
      $region40: #{tpu_custom_call.1} parent=5 // pred_fallthru
        _
    $region6: #{tpu_custom_call.1} parent=1 // loop_footer
      %s19 = sadd.s32 1, %s15
    $region7: #{tpu_custom_call.1} parent=1 // loop_footer_branch
      %14 = sbr.rel target = $region3
    $region8: #{tpu_custom_call.1} parent=1 // loop_exit
      _
    %348 = vsyncpa [#allocation3], 1
    %s349 = scalar_lea.sflag [#allocation3], 1
    %350 = vsyncpa %s349, 1
    %351 = vsyncpa [#allocation5], 1
    %s352 = scalar_lea.sflag [#allocation5], 1
    %353 = vsyncpa %s352, 1

</llo_original>
